<compile_context>
chip_gen: v6e
topology: v6e:2x2x1
jax: 0.10.0
libtpu: 0.0.40
codegen_flags: <defaults>
</compile_context>

<pallas_src>
from functools import partial

import jax
import jax.numpy as jnp
from jax.experimental import pallas as pl
from jax.experimental.pallas import tpu as pltpu


def _attention_kernel(lens_ref, q_ref, pmT_ref, awc_ref, mem_ref,
                      qw_ref, wlocT_ref, v_ref, ctx_ref, attw_ref):
    # Per batch block Bb:
    #   lens_ref  : (B,) int32 in SMEM (scalar-prefetched)
    #   q_ref     : (Bb, 1, R)      compute dtype
    #   pmT_ref   : (Bb, A, T)      compute dtype (processed_memory, T on lanes)
    #   awc_ref   : (Bb, 2, T+K-1)  compute dtype (zero-padded attn-weights cat)
    #   mem_ref   : (Bb, T, E)      compute dtype
    #   qw_ref    : (R, A)          query_layer weight (transposed)
    #   wlocT_ref : (A, 2K)         fused location conv+dense weight, (k, c) cols
    #   v_ref     : (A, 1)          v weight (f32)
    f32 = jnp.float32
    Bb, A, T = pmT_ref.shape
    Tp = awc_ref.shape[2]
    K = Tp - T + 1
    K2 = wlocT_ref.shape[1]

    # --- query path: (Bb, R) @ (R, A), f32 accumulation on the MXU ---
    q = q_ref[...][:, 0, :]                                         # (Bb, R)
    pq = jnp.dot(q, qw_ref[...], preferred_element_type=f32)        # (Bb, A)

    # --- location path: build the 2K tap windows in-kernel (lane slices of
    # the padded history, no K-times-inflated HBM stream) and do the fused
    # conv+dense as one batched matmul with T on lanes.
    x = awc_ref[...]                                                 # (Bb, 2, Tp)
    winT = jnp.concatenate([x[:, :, k:k + T] for k in range(K)],
                           axis=1)                                   # (Bb, 2K, T)
    wlocT = jnp.broadcast_to(wlocT_ref[...][None], (Bb, A, K2))      # (Bb, A, 2K)
    locT = jnp.einsum('bak,bkt->bat', wlocT, winT,
                      preferred_element_type=f32)                    # (Bb, A, T)

    # --- energies: A-contraction is a sublane reduce (T stays on lanes) ---
    h = jnp.tanh(pq[:, :, None] + locT + pmT_ref[...].astype(f32))   # (Bb, A, T)
    vcol = v_ref[...].astype(f32)[None]                              # (1, A, 1)
    e = jnp.sum(h * vcol, axis=1)                                    # (Bb, T)

    # --- length mask from scalar-prefetched lengths (finite fill -> no NaN
    # even for fully masked rows). ---
    # TODO(synk): arbitrary (non-length-derived) masks would need an extra
    # additive-bias input stream instead of the scalar-prefetched lengths.
    start = pl.program_id(0) * Bb
    row_i = jax.lax.broadcasted_iota(jnp.int32, (Bb, T), 0)
    t_i = jax.lax.broadcasted_iota(jnp.int32, (Bb, T), 1)
    len_mat = jnp.zeros((Bb, T), jnp.int32)
    for i in range(Bb):
        len_mat = jnp.where(row_i == i, lens_ref[start + i], len_mat)
    e = jnp.where(t_i < len_mat, e, f32(-1e30))

    # --- softmax over T (lane-dense) ---
    m = jnp.max(e, axis=-1, keepdims=True)
    p = jnp.exp(e - m)
    w = p / jnp.sum(p, axis=-1, keepdims=True)                        # (Bb, T)

    attw_ref[...] = w[:, None, :].astype(attw_ref.dtype)             # (Bb, 1, T)

    # --- context = bmm(weights, memory), f32 accumulation ---
    wq = w[:, None, :].astype(mem_ref.dtype)                          # (Bb, 1, T)
    ctx = jnp.einsum('bqt,bte->bqe', wq, mem_ref[...],
                     preferred_element_type=f32)                       # (Bb, 1, E)
    ctx_ref[...] = ctx.astype(ctx_ref.dtype)


def _pick_batch_block(B, T, E, A, Tp, R, itemsize, budget_bytes=40 << 20):
    # VMEM-aware: 2x (double-buffered) input/output bytes per batch row must
    # stay under the budget; budget chosen to also fit v7x's 64 MiB VMEM.
    row_bytes = itemsize * (T * E + A * T + 2 * Tp + R) + 4 * (E + T)
    max_bb = max(1, budget_bytes // (2 * row_bytes))
    # keep >= 2 grid steps whenever B >= 2 so both v7x TensorCores get work
    cap = B if B < 2 else (B + 1) // 2
    bb = 1
    for cand in range(1, B + 1):
        if B % cand == 0 and cand <= max_bb and cand <= cap:
            bb = cand
    # TODO(synk): if even a single batch row overflows the budget (very long
    # T*E), add a T grid axis marked "arbitrary" with an online-softmax
    # accumulator instead of shrinking the batch block further.
    return bb


@partial(jax.jit, static_argnames=("compute_dtype",))
def attention_forward(query, memory, processed_memory, attention_weights_cat,
                      lengths, qw_t, cw, dw_t, vw,
                      compute_dtype=jnp.bfloat16):
    B, R = query.shape
    _, T, E = memory.shape
    A = processed_memory.shape[-1]
    F, _, K = cw.shape
    pad = (K - 1) // 2
    K2 = 2 * K
    Tp = T + 2 * pad
    cd = compute_dtype

    # Fuse location conv (F,2,K) + location dense (F,A) into one (A, 2K)
    # weight whose columns are ordered (k-major, c-minor), matching the
    # in-kernel tap concatenation order.
    wloc_t = (jnp.transpose(cw, (2, 1, 0)).reshape(K2, F) @ dw_t).T   # (A, 2K)

    q3 = query.reshape(B, 1, R).astype(cd)
    pmT = jnp.transpose(processed_memory, (0, 2, 1)).astype(cd)       # (B, A, T)
    awc_pad = jnp.pad(attention_weights_cat,
                      ((0, 0), (0, 0), (pad, pad))).astype(cd)        # (B, 2, Tp)
    mem = memory.astype(cd)
    qw = qw_t.astype(cd)
    wloc_t = wloc_t.astype(cd)
    v_col = vw.reshape(A, 1).astype(jnp.float32)                      # tiny, keep f32
    lens = lengths.astype(jnp.int32)

    itemsize = jnp.dtype(cd).itemsize
    Bb = _pick_batch_block(B, T, E, A, Tp, R, itemsize)
    grid = (B // Bb,)

    ctx, attw = pl.pallas_call(
        _attention_kernel,
        out_shape=(
            jax.ShapeDtypeStruct((B, 1, E), jnp.float32),
            jax.ShapeDtypeStruct((B, 1, T), jnp.float32),
        ),
        grid_spec=pltpu.PrefetchScalarGridSpec(
            num_scalar_prefetch=1,
            grid=grid,
            in_specs=[
                pl.BlockSpec((Bb, 1, R), lambda b, ln: (b, 0, 0)),
                pl.BlockSpec((Bb, A, T), lambda b, ln: (b, 0, 0)),
                pl.BlockSpec((Bb, 2, Tp), lambda b, ln: (b, 0, 0)),
                pl.BlockSpec((Bb, T, E), lambda b, ln: (b, 0, 0)),
                pl.BlockSpec((R, A), lambda b, ln: (0, 0)),
                pl.BlockSpec((A, K2), lambda b, ln: (0, 0)),
                pl.BlockSpec((A, 1), lambda b, ln: (0, 0)),
            ],
            out_specs=[
                pl.BlockSpec((Bb, 1, E), lambda b, ln: (b, 0, 0)),
                pl.BlockSpec((Bb, 1, T), lambda b, ln: (b, 0, 0)),
            ],
        ),
        compiler_params=pltpu.CompilerParams(
            dimension_semantics=("parallel",),
            vmem_limit_bytes=48 * 1024 * 1024),
    )(lens, q3, pmT, awc_pad, mem, qw, wloc_t, v_col)

    return ctx.reshape(B, E), attw.reshape(B, T)


def _xavier_uniform(key, shape, fan_in, fan_out, gain):
    bound = gain * (6.0 / (fan_in + fan_out)) ** 0.5
    return jax.random.uniform(key, shape, jnp.float32, -bound, bound)


def _reference(query, memory, processed_memory, awc, lengths,
               qw_t, cw, dw_t, vw):
    # pure-JAX f32 reference mirroring the PyTorch forward (unfused path)
    B, T, E = memory.shape
    K = cw.shape[2]
    pad = (K - 1) // 2
    pq = query @ qw_t                                          # (B, A)
    x_pad = jnp.pad(awc, ((0, 0), (0, 0), (pad, pad)))
    windows = jnp.stack([x_pad[:, :, k:k + T] for k in range(K)], axis=-1)
    conv = jnp.einsum('bctk,fck->bft', windows, cw)            # (B, F, T)
    loc = jnp.einsum('bft,fa->bta', conv, dw_t)                # (B, T, A)
    h = jnp.tanh(pq[:, None, :] + loc + processed_memory)
    e = jnp.einsum('bta,a->bt', h, vw[0])
    mask = jnp.arange(T)[None, :] >= lengths[:, None]
    e = jnp.where(mask, -jnp.inf, e)
    w = jax.nn.softmax(e, axis=1)
    ctx = jnp.einsum('bt,bte->be', w, memory)
    return ctx, w


if __name__ == "__main__":
    # small config consistent with the module
    B = 2
    attention_rnn_dim = 32     # R
    embedding_dim = 32         # E
    attention_dim = 16         # A
    n_filters = 8              # F
    kernel_size = 5            # K (odd)
    T = 16                     # encoder timesteps

    key = jax.random.PRNGKey(0)
    ks = jax.random.split(key, 10)
    gain_tanh = 5.0 / 3.0

    # parameters (deterministic xavier-uniform init, torch layouts then transposed)
    qw_torch = _xavier_uniform(ks[0], (attention_dim, attention_rnn_dim),
                               attention_rnn_dim, attention_dim, gain_tanh)
    qw_t = qw_torch.T                                              # (R, A)
    cw = _xavier_uniform(ks[1], (n_filters, 2, kernel_size),
                         2 * kernel_size, n_filters * kernel_size, 1.0)  # (F,2,K)
    dw_torch = _xavier_uniform(ks[2], (attention_dim, n_filters),
                               n_filters, attention_dim, gain_tanh)
    dw_t = dw_torch.T                                              # (F, A)
    vw = _xavier_uniform(ks[3], (1, attention_dim),
                         attention_dim, 1, 1.0)                    # (1, A)
    # NOTE: memory_layer exists in __init__ but is unused in forward
    # (processed_memory is an input), so it is not materialized here.

    # inputs
    query = jax.random.normal(ks[4], (B, attention_rnn_dim), jnp.float32)
    memory = jax.random.normal(ks[5], (B, T, embedding_dim), jnp.float32)
    processed_memory = jax.random.normal(ks[6], (B, T, attention_dim), jnp.float32)
    attention_weights_cat = jax.random.uniform(ks[7], (B, 2, T), jnp.float32)
    lengths = jnp.array([T, T - 5], jnp.int32)   # mask == arange(T) >= length

    ctx_ref, attw_ref = _reference(query, memory, processed_memory,
                                   attention_weights_cat, lengths,
                                   qw_t, cw, dw_t, vw)

    # f32 compute path: tight check against the reference
    ctx, attw = attention_forward(query, memory, processed_memory,
                                  attention_weights_cat, lengths,
                                  qw_t, cw, dw_t, vw,
                                  compute_dtype=jnp.float32)
    jax.block_until_ready((ctx, attw))
    assert jnp.allclose(ctx, ctx_ref, rtol=1e-4, atol=1e-4)
    assert jnp.allclose(attw, attw_ref, rtol=1e-4, atol=1e-4)

    # bf16 compute path (halved HBM bytes): loose check against the f32 ref
    ctx_bf, attw_bf = attention_forward(query, memory, processed_memory,
                                        attention_weights_cat, lengths,
                                        qw_t, cw, dw_t, vw,
                                        compute_dtype=jnp.bfloat16)
    jax.block_until_ready((ctx_bf, attw_bf))
    assert jnp.allclose(ctx_bf, ctx_ref, rtol=1e-1, atol=1e-1)
    assert jnp.allclose(attw_bf, attw_ref, rtol=1e-1, atol=1e-1)

    print("KERNEL_OK")
</pallas_src>

<mosaic_0001>
module attributes {stable_mosaic.version = 11 : i64} {
  func.func @_attention_kernel(%arg0: i32, %arg1: memref<2xi32, #tpu.memory_space<smem>>, %arg2: memref<1x1x32xf32, #tpu.memory_space<vmem>>, %arg3: memref<1x16x16xf32, #tpu.memory_space<vmem>>, %arg4: memref<1x2x20xf32, #tpu.memory_space<vmem>>, %arg5: memref<1x16x32xf32, #tpu.memory_space<vmem>>, %arg6: memref<32x16xf32, #tpu.memory_space<vmem>>, %arg7: memref<16x10xf32, #tpu.memory_space<vmem>>, %arg8: memref<16x1xf32, #tpu.memory_space<vmem>>, %arg9: memref<1x1x32xf32, #tpu.memory_space<vmem>>, %arg10: memref<1x1x16xf32, #tpu.memory_space<vmem>>) attributes {dimension_semantics = [#tpu.dimension_semantics<parallel>], iteration_bounds = array<i64: 2>, scalar_prefetch = 1 : i64, scratch_operands = 0 : i64, tpu.core_type = #tpu.core_type<tc>, window_params = [{transform_indices = @transform_0, window_bounds = array<i64: 1, 1, 32>}, {transform_indices = @transform_1, window_bounds = array<i64: 1, 16, 16>}, {transform_indices = @transform_2, window_bounds = array<i64: 1, 2, 20>}, {transform_indices = @transform_3, window_bounds = array<i64: 1, 16, 32>}, {pipeline_mode = #tpu.pipeline_mode<synchronous>, transform_indices = @transform_4, window_bounds = array<i64: 32, 16>}, {pipeline_mode = #tpu.pipeline_mode<synchronous>, transform_indices = @transform_5, window_bounds = array<i64: 16, 10>}, {pipeline_mode = #tpu.pipeline_mode<synchronous>, transform_indices = @transform_6, window_bounds = array<i64: 16, 1>}, {transform_indices = @transform_7, window_bounds = array<i64: 1, 1, 32>}, {transform_indices = @transform_8, window_bounds = array<i64: 1, 1, 16>}]} {
    %c0 = arith.constant 0 : index
    %c0_0 = arith.constant 0 : index
    %c0_1 = arith.constant 0 : index
    %0 = vector.load %arg2[%c0, %c0_0, %c0_1] : memref<1x1x32xf32, #tpu.memory_space<vmem>>, vector<1x1x32xf32>
    %1 = vector.shape_cast %0 : vector<1x1x32xf32> to vector<1x32xf32>
    %c0_2 = arith.constant 0 : index
    %c0_3 = arith.constant 0 : index
    %2 = vector.load %arg6[%c0_2, %c0_3] : memref<32x16xf32, #tpu.memory_space<vmem>>, vector<32x16xf32>
    %cst = arith.constant dense<0.000000e+00> : vector<1x16xf32>
    %3 = tpu.matmul %1, %2, %cst {dimension_numbers = #tpu.dot_dimension_numbers<[1], [0], [0], [1], [0, 0, 1, 1], [], []>} : vector<1x32xf32>, vector<32x16xf32>, vector<1x16xf32> -> vector<1x16xf32>
    %c0_4 = arith.constant 0 : index
    %c0_5 = arith.constant 0 : index
    %c0_6 = arith.constant 0 : index
    %4 = vector.load %arg4[%c0_4, %c0_5, %c0_6] : memref<1x2x20xf32, #tpu.memory_space<vmem>>, vector<1x2x20xf32>
    %5 = vector.extract_strided_slice %4 {offsets = [0, 0, 0], sizes = [1, 2, 16], strides = [1, 1, 1]} : vector<1x2x20xf32> to vector<1x2x16xf32>
    %6 = vector.extract_strided_slice %4 {offsets = [0, 0, 1], sizes = [1, 2, 16], strides = [1, 1, 1]} : vector<1x2x20xf32> to vector<1x2x16xf32>
    %7 = vector.extract_strided_slice %4 {offsets = [0, 0, 2], sizes = [1, 2, 16], strides = [1, 1, 1]} : vector<1x2x20xf32> to vector<1x2x16xf32>
    %8 = vector.extract_strided_slice %4 {offsets = [0, 0, 3], sizes = [1, 2, 16], strides = [1, 1, 1]} : vector<1x2x20xf32> to vector<1x2x16xf32>
    %9 = vector.extract_strided_slice %4 {offsets = [0, 0, 4], sizes = [1, 2, 16], strides = [1, 1, 1]} : vector<1x2x20xf32> to vector<1x2x16xf32>
    %10 = tpu.concatenate %5, %6, %7, %8, %9 in 1 : vector<1x2x16xf32>, vector<1x2x16xf32>, vector<1x2x16xf32>, vector<1x2x16xf32>, vector<1x2x16xf32> -> vector<1x10x16xf32>
    %c0_7 = arith.constant 0 : index
    %c0_8 = arith.constant 0 : index
    %11 = vector.load %arg7[%c0_7, %c0_8] : memref<16x10xf32, #tpu.memory_space<vmem>>, vector<16x10xf32>
    %12 = vector.shape_cast %11 : vector<16x10xf32> to vector<1x16x10xf32>
    "tpu.trace_start"() <{level = 10 : i32, message = "bak,bkt->bat"}> : () -> ()
    %cst_9 = arith.constant dense<0.000000e+00> : vector<1x16x16xf32>
    %13 = tpu.matmul %12, %10, %cst_9 {dimension_numbers = #tpu.dot_dimension_numbers<[2], [1], [1], [2], [0, 0, 0, 1, 1, 2], [0], [0]>} : vector<1x16x10xf32>, vector<1x10x16xf32>, vector<1x16x16xf32> -> vector<1x16x16xf32>
    "tpu.trace_stop"() : () -> ()
    %14 = vector.shape_cast %3 : vector<1x16xf32> to vector<1x16x1xf32>
    %15 = vector.broadcast %14 : vector<1x16x1xf32> to vector<1x16x16xf32>
    %16 = arith.addf %15, %13 : vector<1x16x16xf32>
    %c0_10 = arith.constant 0 : index
    %c0_11 = arith.constant 0 : index
    %c0_12 = arith.constant 0 : index
    %17 = vector.load %arg3[%c0_10, %c0_11, %c0_12] : memref<1x16x16xf32, #tpu.memory_space<vmem>>, vector<1x16x16xf32>
    %18 = arith.addf %16, %17 : vector<1x16x16xf32>
    %19 = math.tanh %18 : vector<1x16x16xf32>
    %c0_13 = arith.constant 0 : index
    %c0_14 = arith.constant 0 : index
    %20 = vector.load %arg8[%c0_13, %c0_14] : memref<16x1xf32, #tpu.memory_space<vmem>>, vector<16x1xf32>
    %21 = vector.shape_cast %20 : vector<16x1xf32> to vector<1x16x1xf32>
    %22 = vector.broadcast %21 : vector<1x16x1xf32> to vector<1x16x16xf32>
    %23 = arith.mulf %19, %22 : vector<1x16x16xf32>
    %cst_15 = arith.constant dense<0.000000e+00> : vector<1x16xf32>
    %24 = vector.multi_reduction <add>, %23, %cst_15 [1] : vector<1x16x16xf32> to vector<1x16xf32>
    %c1_i32 = arith.constant 1 : i32
    %25 = arith.muli %arg0, %c1_i32 : i32
    %26 = tpu.iota {dimensions = array<i32: 0>} : vector<1x16xi32>
    %27 = tpu.iota {dimensions = array<i32: 1>} : vector<1x16xi32>
    %c0_i32 = arith.constant 0 : i32
    %28 = vector.broadcast %c0_i32 : i32 to vector<1x16xi32>
    %c0_i32_16 = arith.constant 0 : i32
    %29 = vector.broadcast %c0_i32_16 : i32 to vector<1x16xi32>
    %30 = arith.cmpi eq, %26, %29 : vector<1x16xi32>
    %c0_i32_17 = arith.constant 0 : i32
    %31 = arith.addi %25, %c0_i32_17 : i32
    %32 = arith.index_cast %31 : i32 to index
    %33 = memref.load %arg1[%32] : memref<2xi32, #tpu.memory_space<smem>>
    %34 = vector.broadcast %33 : i32 to vector<1x16xi32>
    %35 = arith.select %30, %34, %28 : vector<1x16xi1>, vector<1x16xi32>
    %36 = arith.cmpi slt, %27, %35 : vector<1x16xi32>
    %cst_18 = arith.constant -1.000000e+30 : f32
    %37 = vector.broadcast %cst_18 : f32 to vector<1x16xf32>
    %38 = arith.select %36, %24, %37 : vector<1x16xi1>, vector<1x16xf32>
    %cst_19 = arith.constant dense<0xFF800000> : vector<1xf32>
    %39 = vector.multi_reduction <maximumf>, %38, %cst_19 [1] : vector<1x16xf32> to vector<1xf32>
    %40 = vector.shape_cast %39 : vector<1xf32> to vector<1x1xf32>
    %41 = vector.broadcast %40 : vector<1x1xf32> to vector<1x16xf32>
    %42 = arith.subf %38, %41 : vector<1x16xf32>
    %43 = math.exp %42 : vector<1x16xf32>
    %cst_20 = arith.constant dense<0.000000e+00> : vector<1xf32>
    %44 = vector.multi_reduction <add>, %43, %cst_20 [1] : vector<1x16xf32> to vector<1xf32>
    %45 = vector.shape_cast %44 : vector<1xf32> to vector<1x1xf32>
    %46 = vector.broadcast %45 : vector<1x1xf32> to vector<1x16xf32>
    %47 = arith.divf %43, %46 : vector<1x16xf32>
    %48 = vector.shape_cast %47 : vector<1x16xf32> to vector<1x1x16xf32>
    %c0_21 = arith.constant 0 : index
    %c0_22 = arith.constant 0 : index
    %c0_23 = arith.constant 0 : index
    %49 = vector.load %arg10[%c0_21, %c0_22, %c0_23] : memref<1x1x16xf32, #tpu.memory_space<vmem>>, vector<1x1x16xf32>
    tpu.vector_store %arg10[%c0_21, %c0_22, %c0_23], %48 {strides = array<i32>} : memref<1x1x16xf32, #tpu.memory_space<vmem>>, vector<1x1x16xf32>,
    %50 = vector.shape_cast %47 : vector<1x16xf32> to vector<1x1x16xf32>
    %c0_24 = arith.constant 0 : index
    %c0_25 = arith.constant 0 : index
    %c0_26 = arith.constant 0 : index
    %51 = vector.load %arg5[%c0_24, %c0_25, %c0_26] : memref<1x16x32xf32, #tpu.memory_space<vmem>>, vector<1x16x32xf32>
    "tpu.trace_start"() <{level = 10 : i32, message = "bqt,bte->bqe"}> : () -> ()
    %cst_27 = arith.constant dense<0.000000e+00> : vector<1x1x32xf32>
    %52 = tpu.matmul %50, %51, %cst_27 {dimension_numbers = #tpu.dot_dimension_numbers<[2], [1], [1], [2], [0, 0, 0, 1, 1, 2], [0], [0]>} : vector<1x1x16xf32>, vector<1x16x32xf32>, vector<1x1x32xf32> -> vector<1x1x32xf32>
    "tpu.trace_stop"() : () -> ()
    %c0_28 = arith.constant 0 : index
    %c0_29 = arith.constant 0 : index
    %c0_30 = arith.constant 0 : index
    %53 = vector.load %arg9[%c0_28, %c0_29, %c0_30] : memref<1x1x32xf32, #tpu.memory_space<vmem>>, vector<1x1x32xf32>
    tpu.vector_store %arg9[%c0_28, %c0_29, %c0_30], %52 {strides = array<i32>} : memref<1x1x32xf32, #tpu.memory_space<vmem>>, vector<1x1x32xf32>,
    return
  }
  func.func @transform_0(%arg0: i32, %arg1: memref<2xi32, #tpu.memory_space<smem>>) -> (i32, i32, i32) {
    %c0_i32 = arith.constant 0 : i32
    %c0_i32_0 = arith.constant 0 : i32
    %c0_i32_1 = arith.constant 0 : i32
    return %arg0, %c0_i32, %c0_i32_0 : i32, i32, i32
  }
  func.func @transform_1(%arg0: i32, %arg1: memref<2xi32, #tpu.memory_space<smem>>) -> (i32, i32, i32) {
    %c0_i32 = arith.constant 0 : i32
    %c0_i32_0 = arith.constant 0 : i32
    %c0_i32_1 = arith.constant 0 : i32
    return %arg0, %c0_i32, %c0_i32_0 : i32, i32, i32
  }
  func.func @transform_2(%arg0: i32, %arg1: memref<2xi32, #tpu.memory_space<smem>>) -> (i32, i32, i32) {
    %c0_i32 = arith.constant 0 : i32
    %c0_i32_0 = arith.constant 0 : i32
    %c0_i32_1 = arith.constant 0 : i32
    return %arg0, %c0_i32, %c0_i32_0 : i32, i32, i32
  }
  func.func @transform_3(%arg0: i32, %arg1: memref<2xi32, #tpu.memory_space<smem>>) -> (i32, i32, i32) {
    %c0_i32 = arith.constant 0 : i32
    %c0_i32_0 = arith.constant 0 : i32
    %c0_i32_1 = arith.constant 0 : i32
    return %arg0, %c0_i32, %c0_i32_0 : i32, i32, i32
  }
  func.func @transform_4(%arg0: i32, %arg1: memref<2xi32, #tpu.memory_space<smem>>) -> (i32, i32) {
    %c0_i32 = arith.constant 0 : i32
    %c0_i32_0 = arith.constant 0 : i32
    %c0_i32_1 = arith.constant 0 : i32
    return %c0_i32, %c0_i32_0 : i32, i32
  }
  func.func @transform_5(%arg0: i32, %arg1: memref<2xi32, #tpu.memory_space<smem>>) -> (i32, i32) {
    %c0_i32 = arith.constant 0 : i32
    %c0_i32_0 = arith.constant 0 : i32
    %c0_i32_1 = arith.constant 0 : i32
    return %c0_i32, %c0_i32_0 : i32, i32
  }
  func.func @transform_6(%arg0: i32, %arg1: memref<2xi32, #tpu.memory_space<smem>>) -> (i32, i32) {
    %c0_i32 = arith.constant 0 : i32
    %c0_i32_0 = arith.constant 0 : i32
    %c0_i32_1 = arith.constant 0 : i32
    return %c0_i32, %c0_i32_0 : i32, i32
  }
  func.func @transform_7(%arg0: i32, %arg1: memref<2xi32, #tpu.memory_space<smem>>) -> (i32, i32, i32) {
    %c0_i32 = arith.constant 0 : i32
    %c0_i32_0 = arith.constant 0 : i32
    %c0_i32_1 = arith.constant 0 : i32
    return %arg0, %c0_i32, %c0_i32_0 : i32, i32, i32
  }
  func.func @transform_8(%arg0: i32, %arg1: memref<2xi32, #tpu.memory_space<smem>>) -> (i32, i32, i32) {
    %c0_i32 = arith.constant 0 : i32
    %c0_i32_0 = arith.constant 0 : i32
    %c0_i32_1 = arith.constant 0 : i32
    return %arg0, %c0_i32, %c0_i32_0 : i32, i32, i32
  }
}

</mosaic_0001>

<llo_original>
// kernel: attention_forward.1
$region0: #{attention_forward.1}
  #allocation0 [shape = 'u32[]', space=smem, size = 0x4, offset = 0x4, fixed_abs, tag = 'smem constant byte address 0x4 - core index']
  #allocation1 [shape = 'u32[144,128]{1,0:T(1,128)}', space=vmem, size = 0x12000, scoped, tag = 'internal scratch']
  #allocation2 [shape = 's32[1]{0}', space=sflag, size = 0x4, scoped, tag = 'scoped memory for attention_forward.1']
  #allocation3 [shape = 'u8[512]{0}', space=smem, size = 0x200, scoped, tag = 'prefetched SMEM operand 0']
  %s0 = inlined_call_operand.vmem [shape: s32[2], index: 0, kind: input, shape index: {}]
  %s1 = inlined_call_operand.vmem [shape: f32[2,1,32], index: 1, kind: input, shape index: {}]
  %s2 = inlined_call_operand.vmem [shape: f32[2,16,16], index: 2, kind: input, shape index: {}]
  %s3 = inlined_call_operand.vmem [shape: f32[2,2,20], index: 3, kind: input, shape index: {}]
  %s4 = inlined_call_operand.vmem [shape: f32[2,16,32], index: 4, kind: input, shape index: {}]
  %s5 = inlined_call_operand.vmem [shape: f32[32,16], index: 5, kind: input, shape index: {}]
  %s6 = inlined_call_operand.vmem [shape: f32[16,10], index: 6, kind: input, shape index: {}]
  %s7 = inlined_call_operand.vmem [shape: f32[16,1], index: 7, kind: input, shape index: {}]
  %s8 = inlined_call_operand.hbm [shape: f32[2,1,32], index: 8, kind: output, shape index: {0}]
  %s9 = inlined_call_operand.hbm [shape: f32[2,1,16], index: 9, kind: output, shape index: {1}]
  %10 = xla_tuple %s8, %s9
  %s11 = sld [smem:[#allocation0]]
  $region69: #{attention_forward.1} parent=0
    _
  %s13 = ssub.s32 1, %s11
  %s14 = scalar_select 0, %s13, %s11
  %s15 = sshll.u32 %s0, 4
  %s16 = int_to_ptr.vmem [resolvable:$true] %s15
  %18 = dma.vmem_to_smem %s16, 16, [#allocation3], [#allocation2]
  %19 = dma.done [#allocation2], 16
  %20 = sfence
  $region1: #{attention_forward.1} parent=0
    #allocation4 [shape = 'u8[1024]{0}', space=vmem, size = 0x400, scoped, tag = 'output window, operand 0']
    #allocation5 [shape = 's32[2]{0}', space=sflag, size = 0x8, scoped, tag = 'scoped memory for attention_forward.1']
    #allocation6 [shape = 'u8[1024]{0}', space=vmem, size = 0x400, scoped, tag = 'output window, operand 1']
    #allocation7 [shape = 's32[2]{0}', space=sflag, size = 0x8, scoped, tag = 'scoped memory for attention_forward.1']
    %21 = vsyncpa [#allocation5], 0
    %s22 = scalar_lea.sflag [#allocation5], 1
    %23 = vsyncpa %s22, 0
    %24 = vsyncpa [#allocation7], 0
    %s25 = scalar_lea.sflag [#allocation7], 1
    %26 = vsyncpa %s25, 0
    loop: start=0, step=1, limit=4
    $region2: #{attention_forward.1} parent=1 // loop_pre_header
      _
    $region3: #{attention_forward.1} parent=1 // loop_header
      %s28 = sphi 0, %s32
      %p29 = scmp.ge.s32.totalorder %s28, 4
      %s38 = sphi 0, %s40
      %s41 = sphi 0, %s38
      %s42 = sphi 0, %s41
      %s58 = sphi 0, %s42
      %s64 = sphi 0, %s66
      %s67 = sphi 0, %s64
      %s68 = sphi 0, %s67
      %s84 = sphi 0, %s68
      %s90 = sphi 0, %s92
      %s93 = sphi 0, %s90
      %s94 = sphi 0, %s93
      %s110 = sphi 0, %s94
      %s116 = sphi 0, %s118
      %s119 = sphi 0, %s116
      %s120 = sphi 0, %s119
      %s136 = sphi 0, %s120
      %s140 = sphi 0, %s140
      %s142 = sphi 0, %s140
      %s143 = sphi 0, %s142
      %s157 = sphi 0, %s143
      %s161 = sphi 0, %s161
      %s163 = sphi 0, %s161
      %s164 = sphi 0, %s163
      %s178 = sphi 0, %s164
      %s182 = sphi 0, %s182
      %s184 = sphi 0, %s182
      %s185 = sphi 0, %s184
      %s199 = sphi 0, %s185
      %s205 = sphi 0, %s207
      %s208 = sphi 0, %s205
      %s209 = sphi 0, %s208
      %s225 = sphi 0, %s209
      %s231 = sphi 0, %s233
      %s234 = sphi 0, %s231
      %s235 = sphi 0, %s234
      %s251 = sphi 0, %s235
    $region4: #{attention_forward.1} parent=1 // loop_header_branch
      %31 = sbr.rel (%p29) target = $region8
    $region5: #{attention_forward.1} parent=1 // loop_body
      %s33 = ssub.s32 %s28, 1
      %s34 = ssub.s32 %s28, 2
      %s35 = sadd.s32 %s28, 1
      %s36 = ssub.s32 %s28, %s35
      %p37 = scmp.eq.s32.totalorder %s36, 0
      %s39 = sadd.s32 %s38, 1
      %s40 = scalar_select %p37, %s38, %s39
      %p43 = pneg %p37
      %p44 = scmp.eq.s32.totalorder %s28, 1
      %p45 = por %p43, %p44
      %p46 = scmp.ne.s32.totalorder %s38, %s41
      %p47 = scmp.eq.s32.totalorder %s28, 0
      %p48 = por %p46, %p47
      %p49 = scmp.ne.s32.totalorder %s38, %s41
      %p50 = scmp.eq.s32.totalorder %s33, 1
      %p51 = por %p49, %p50
      %p52 = scmp.ne.s32.totalorder %s41, %s42
      %p53 = scmp.eq.s32.totalorder %s33, 0
      %p54 = por %p52, %p53
      %p55 = scmp.ne.s32.totalorder %s41, %s42
      %p56 = scmp.eq.s32.totalorder %s34, 1
      %p57 = por %p55, %p56
      %p59 = scmp.ne.s32.totalorder %s42, %s58
      %p60 = scmp.eq.s32.totalorder %s34, 0
      %p61 = por %p59, %p60
      %s62 = ssub.s32 %s28, %s35
      %p63 = scmp.eq.s32.totalorder %s62, 0
      %s65 = sadd.s32 %s64, 1
      %s66 = scalar_select %p63, %s64, %s65
      %p69 = pneg %p63
      %p70 = scmp.eq.s32.totalorder %s28, 1
      %p71 = por %p69, %p70
      %p72 = scmp.ne.s32.totalorder %s64, %s67
      %p73 = scmp.eq.s32.totalorder %s28, 0
      %p74 = por %p72, %p73
      %p75 = scmp.ne.s32.totalorder %s64, %s67
      %p76 = scmp.eq.s32.totalorder %s33, 1
      %p77 = por %p75, %p76
      %p78 = scmp.ne.s32.totalorder %s67, %s68
      %p79 = scmp.eq.s32.totalorder %s33, 0
      %p80 = por %p78, %p79
      %p81 = scmp.ne.s32.totalorder %s67, %s68
      %p82 = scmp.eq.s32.totalorder %s34, 1
      %p83 = por %p81, %p82
      %p85 = scmp.ne.s32.totalorder %s68, %s84
      %p86 = scmp.eq.s32.totalorder %s34, 0
      %p87 = por %p85, %p86
      %s88 = ssub.s32 %s28, %s35
      %p89 = scmp.eq.s32.totalorder %s88, 0
      %s91 = sadd.s32 %s90, 1
      %s92 = scalar_select %p89, %s90, %s91
      %p95 = pneg %p89
      %p96 = scmp.eq.s32.totalorder %s28, 1
      %p97 = por %p95, %p96
      %p98 = scmp.ne.s32.totalorder %s90, %s93
      %p99 = scmp.eq.s32.totalorder %s28, 0
      %p100 = por %p98, %p99
      %p101 = scmp.ne.s32.totalorder %s90, %s93
      %p102 = scmp.eq.s32.totalorder %s33, 1
      %p103 = por %p101, %p102
      %p104 = scmp.ne.s32.totalorder %s93, %s94
      %p105 = scmp.eq.s32.totalorder %s33, 0
      %p106 = por %p104, %p105
      %p107 = scmp.ne.s32.totalorder %s93, %s94
      %p108 = scmp.eq.s32.totalorder %s34, 1
      %p109 = por %p107, %p108
      %p111 = scmp.ne.s32.totalorder %s94, %s110
      %p112 = scmp.eq.s32.totalorder %s34, 0
      %p113 = por %p111, %p112
      %s114 = ssub.s32 %s28, %s35
      %p115 = scmp.eq.s32.totalorder %s114, 0
      %s117 = sadd.s32 %s116, 1
      %s118 = scalar_select %p115, %s116, %s117
      %p121 = pneg %p115
      %p122 = scmp.eq.s32.totalorder %s28, 1
      %p123 = por %p121, %p122
      %p124 = scmp.ne.s32.totalorder %s116, %s119
      %p125 = scmp.eq.s32.totalorder %s28, 0
      %p126 = por %p124, %p125
      %p127 = scmp.ne.s32.totalorder %s116, %s119
      %p128 = scmp.eq.s32.totalorder %s33, 1
      %p129 = por %p127, %p128
      %p130 = scmp.ne.s32.totalorder %s119, %s120
      %p131 = scmp.eq.s32.totalorder %s33, 0
      %p132 = por %p130, %p131
      %p133 = scmp.ne.s32.totalorder %s119, %s120
      %p134 = scmp.eq.s32.totalorder %s34, 1
      %p135 = por %p133, %p134
      %p137 = scmp.ne.s32.totalorder %s120, %s136
      %p138 = scmp.eq.s32.totalorder %s34, 0
      %p139 = por %p137, %p138
      %s141 = sadd.s32 %s140, 1
      %p144 = scmp.eq.s32.totalorder %s28, 1
      %p145 = scmp.ne.s32.totalorder %s140, %s142
      %p146 = scmp.eq.s32.totalorder %s28, 0
      %p147 = por %p145, %p146
      %p148 = scmp.ne.s32.totalorder %s140, %s142
      %p149 = scmp.eq.s32.totalorder %s33, 1
      %p150 = por %p148, %p149
      %p151 = scmp.ne.s32.totalorder %s142, %s143
      %p152 = scmp.eq.s32.totalorder %s33, 0
      %p153 = por %p151, %p152
      %p154 = scmp.ne.s32.totalorder %s142, %s143
      %p155 = scmp.eq.s32.totalorder %s34, 1
      %p156 = por %p154, %p155
      %p158 = scmp.ne.s32.totalorder %s143, %s157
      %p159 = scmp.eq.s32.totalorder %s34, 0
      %p160 = por %p158, %p159
      %s162 = sadd.s32 %s161, 1
      %p165 = scmp.eq.s32.totalorder %s28, 1
      %p166 = scmp.ne.s32.totalorder %s161, %s163
      %p167 = scmp.eq.s32.totalorder %s28, 0
      %p168 = por %p166, %p167
      %p169 = scmp.ne.s32.totalorder %s161, %s163
      %p170 = scmp.eq.s32.totalorder %s33, 1
      %p171 = por %p169, %p170
      %p172 = scmp.ne.s32.totalorder %s163, %s164
      %p173 = scmp.eq.s32.totalorder %s33, 0
      %p174 = por %p172, %p173
      %p175 = scmp.ne.s32.totalorder %s163, %s164
      %p176 = scmp.eq.s32.totalorder %s34, 1
      %p177 = por %p175, %p176
      %p179 = scmp.ne.s32.totalorder %s164, %s178
      %p180 = scmp.eq.s32.totalorder %s34, 0
      %p181 = por %p179, %p180
      %s183 = sadd.s32 %s182, 1
      %p186 = scmp.eq.s32.totalorder %s28, 1
      %p187 = scmp.ne.s32.totalorder %s182, %s184
      %p188 = scmp.eq.s32.totalorder %s28, 0
      %p189 = por %p187, %p188
      %p190 = scmp.ne.s32.totalorder %s182, %s184
      %p191 = scmp.eq.s32.totalorder %s33, 1
      %p192 = por %p190, %p191
      %p193 = scmp.ne.s32.totalorder %s184, %s185
      %p194 = scmp.eq.s32.totalorder %s33, 0
      %p195 = por %p193, %p194
      %p196 = scmp.ne.s32.totalorder %s184, %s185
      %p197 = scmp.eq.s32.totalorder %s34, 1
      %p198 = por %p196, %p197
      %p200 = scmp.ne.s32.totalorder %s185, %s199
      %p201 = scmp.eq.s32.totalorder %s34, 0
      %p202 = por %p200, %p201
      %s203 = ssub.s32 %s28, %s35
      %p204 = scmp.eq.s32.totalorder %s203, 0
      %s206 = sadd.s32 %s205, 1
      %s207 = scalar_select %p204, %s205, %s206
      %p210 = pneg %p204
      %p211 = scmp.eq.s32.totalorder %s28, 1
      %p212 = por %p210, %p211
      %p213 = scmp.ne.s32.totalorder %s205, %s208
      %p214 = scmp.eq.s32.totalorder %s28, 0
      %p215 = por %p213, %p214
      %p216 = scmp.ne.s32.totalorder %s205, %s208
      %p217 = scmp.eq.s32.totalorder %s33, 1
      %p218 = por %p216, %p217
      %p219 = scmp.ne.s32.totalorder %s208, %s209
      %p220 = scmp.eq.s32.totalorder %s33, 0
      %p221 = por %p219, %p220
      %p222 = scmp.ne.s32.totalorder %s208, %s209
      %p223 = scmp.eq.s32.totalorder %s34, 1
      %p224 = por %p222, %p223
      %p226 = scmp.ne.s32.totalorder %s209, %s225
      %p227 = scmp.eq.s32.totalorder %s34, 0
      %p228 = por %p226, %p227
      %s229 = ssub.s32 %s28, %s35
      %p230 = scmp.eq.s32.totalorder %s229, 0
      %s232 = sadd.s32 %s231, 1
      %s233 = scalar_select %p230, %s231, %s232
      %p236 = pneg %p230
      %p237 = scmp.eq.s32.totalorder %s28, 1
      %p238 = por %p236, %p237
      %p239 = scmp.ne.s32.totalorder %s231, %s234
      %p240 = scmp.eq.s32.totalorder %s28, 0
      %p241 = por %p239, %p240
      %p242 = scmp.ne.s32.totalorder %s231, %s234
      %p243 = scmp.eq.s32.totalorder %s33, 1
      %p244 = por %p242, %p243
      %p245 = scmp.ne.s32.totalorder %s234, %s235
      %p246 = scmp.eq.s32.totalorder %s33, 0
      %p247 = por %p245, %p246
      %p248 = scmp.ne.s32.totalorder %s234, %s235
      %p249 = scmp.eq.s32.totalorder %s34, 1
      %p250 = por %p248, %p249
      %p252 = scmp.ne.s32.totalorder %s235, %s251
      %p253 = scmp.eq.s32.totalorder %s34, 0
      %p254 = por %p252, %p253
      %p255 = scmp.le.s32.totalorder 1, %s28
      %p256 = scmp.lt.s32.totalorder %s28, 3
      %p257 = pnand %p255, %p256
      %p258 = pneg %p257
      // Predicated region
      $region9: #{attention_forward.1} parent=5 // pred_check
        _
      $region10: #{attention_forward.1} parent=5 // pred_check_branch
        %260 = sbr.rel (%p257) target = $region12
      $region11: #{attention_forward.1} parent=5 // pred_region
        %s261 = ssub.s32 %s28, 1
        // Predicated region
        $region13: #{attention_forward.1} parent=11 // pred_check
          %p262 = pneg %p153
        $region14: #{attention_forward.1} parent=11 // pred_check_branch
          %264 = sbr.rel (%p262) target = $region16
        $region15: #{attention_forward.1} parent=11 // pred_region
          _
        $region16: #{attention_forward.1} parent=11 // pred_fallthru
          _
        // Predicated region
        $region17: #{attention_forward.1} parent=11 // pred_check
          %p265 = pneg %p174
        $region18: #{attention_forward.1} parent=11 // pred_check_branch
          %267 = sbr.rel (%p265) target = $region20
        $region19: #{attention_forward.1} parent=11 // pred_region
          _
        $region20: #{attention_forward.1} parent=11 // pred_fallthru
          _
        // Predicated region
        $region21: #{attention_forward.1} parent=11 // pred_check
          %p268 = pneg %p195
        $region22: #{attention_forward.1} parent=11 // pred_check_branch
          %270 = sbr.rel (%p268) target = $region24
        $region23: #{attention_forward.1} parent=11 // pred_region
          _
        $region24: #{attention_forward.1} parent=11 // pred_fallthru
          _
      $region12: #{attention_forward.1} parent=5 // pred_fallthru
        _
      %p271 = scmp.lt.s32.totalorder %s28, 2
      // Predicated region
      $region25: #{attention_forward.1} parent=5 // pred_check
        %p272 = pneg %p271
      $region26: #{attention_forward.1} parent=5 // pred_check_branch
        %274 = sbr.rel (%p272) target = $region28
      $region27: #{attention_forward.1} parent=5 // pred_region
        // Predicated region
        $region29: #{attention_forward.1} parent=27 // pred_check
          %p275 = pneg %p48
        $region30: #{attention_forward.1} parent=27 // pred_check_branch
          %277 = sbr.rel (%p275) target = $region32
        $region31: #{attention_forward.1} parent=27 // pred_region
          %p278 = scmp.lt.s32.totalorder %s28, 1
          %s279 = scalar_select %p278, %s28, 1
          %s280 = scalar_lea.vmem %s1, %s279
        $region32: #{attention_forward.1} parent=27 // pred_fallthru
          _
        // Predicated region
        $region33: #{attention_forward.1} parent=27 // pred_check
          %p281 = pneg %p74
        $region34: #{attention_forward.1} parent=27 // pred_check_branch
          %283 = sbr.rel (%p281) target = $region36
        $region35: #{attention_forward.1} parent=27 // pred_region
          %p284 = scmp.lt.s32.totalorder %s28, 1
          %s285 = scalar_select %p284, %s28, 1
          %s286 = smul.addr %s285, 2
          %s287 = smul.addr %s286, 8
          %s288 = scalar_lea.vmem %s2, %s287
        $region36: #{attention_forward.1} parent=27 // pred_fallthru
          _
        // Predicated region
        $region37: #{attention_forward.1} parent=27 // pred_check
          %p289 = pneg %p100
        $region38: #{attention_forward.1} parent=27 // pred_check_branch
          %291 = sbr.rel (%p289) target = $region40
        $region39: #{attention_forward.1} parent=27 // pred_region
          %p292 = scmp.lt.s32.totalorder %s28, 1
          %s293 = scalar_select %p292, %s28, 1
          %s294 = smul.addr %s293, 2
          %s295 = scalar_lea.vmem %s3, %s294
        $region40: #{attention_forward.1} parent=27 // pred_fallthru
          _
        // Predicated region
        $region41: #{attention_forward.1} parent=27 // pred_check
          %p296 = pneg %p126
        $region42: #{attention_forward.1} parent=27 // pred_check_branch
          %298 = sbr.rel (%p296) target = $region44
        $region43: #{attention_forward.1} parent=27 // pred_region
          %p299 = scmp.lt.s32.totalorder %s28, 1
          %s300 = scalar_select %p299, %s28, 1
          %s301 = smul.addr %s300, 2
          %s302 = smul.addr %s301, 8
          %s303 = scalar_lea.vmem %s4, %s302
        $region44: #{attention_forward.1} parent=27 // pred_fallthru
          _
      $region28: #{attention_forward.1} parent=5 // pred_fallthru
        _
      %p304 = scmp.le.s32.totalorder 1, %s28
      %p305 = scmp.lt.s32.totalorder %s28, 3
      %p306 = pnand %p304, %p305
      %p307 = pneg %p306
      // Predicated region
      $region45: #{attention_forward.1} parent=5 // pred_check
        _
      $region46: #{attention_forward.1} parent=5 // pred_check_branch
        %309 = sbr.rel (%p306) target = $region48
      $region47: #{attention_forward.1} parent=5 // pred_region
        %s310 = ssub.s32 %s28, 1
        %p311 = scmp.lt.s32.totalorder %s33, 1
        %s312 = scalar_select %p311, %s33, 1
        %s313 = scalar_lea.vmem %s1, %s312
        %p314 = pneg %p54
        %p315 = pneg %p51
        %p316 = scmp.lt.s32.totalorder %s33, 1
        %s317 = scalar_select %p316, %s33, 1
        %s318 = smul.addr %s317, 2
        %s319 = smul.addr %s318, 8
        %s320 = scalar_lea.vmem %s2, %s319
        %p321 = pneg %p80
        %p322 = pneg %p77
        %p323 = scmp.lt.s32.totalorder %s33, 1
        %s324 = scalar_select %p323, %s33, 1
        %s325 = smul.addr %s324, 2
        %s326 = scalar_lea.vmem %s3, %s325
        %p327 = pneg %p106
        %p328 = pneg %p103
        %p329 = scmp.lt.s32.totalorder %s33, 1
        %s330 = scalar_select %p329, %s33, 1
        %s331 = smul.addr %s330, 2
        %s332 = smul.addr %s331, 8
        %s333 = scalar_lea.vmem %s4, %s332
        %p334 = pneg %p132
        %p335 = pneg %p129
        %p336 = pneg %p153
        %p337 = pneg %p150
        %p338 = pneg %p174
        %p339 = pneg %p171
        %p340 = pneg %p195
        %p341 = pneg %p192
        %p342 = pneg %p221
        %p343 = pneg %p218
        %s344 = sand.u32 %s208, 1
        %s345 = scalar_lea.sflag [#allocation5], %s344
        %s346 = sand.u32 %s208, 1
        %s347 = scalar_lea.vmem [#allocation4], %s346
        %p348 = pneg %p247
        %p349 = pneg %p244
        %s350 = sand.u32 %s234, 1
        %s351 = scalar_lea.sflag [#allocation7], %s350
        %s352 = sand.u32 %s234, 1
        %s353 = scalar_lea.vmem [#allocation6], %s352
        %p354 = scmp.lt.s32.totalorder %s33, 1
        %s355 = scalar_select %p354, %s33, 1
        %s356 = scalar_lea.vmem %s1, %s355
        %p357 = scmp.lt.s32.totalorder %s33, 1
        %s358 = scalar_select %p357, %s33, 1
        %s359 = smul.addr %s358, 2
        %s360 = smul.addr %s359, 8
        %s361 = scalar_lea.vmem %s2, %s360
        %p362 = scmp.lt.s32.totalorder %s33, 1
        %s363 = scalar_select %p362, %s33, 1
        %s364 = smul.addr %s363, 2
        %s365 = scalar_lea.vmem %s3, %s364
        %p366 = scmp.lt.s32.totalorder %s33, 1
        %s367 = scalar_select %p366, %s33, 1
        %s368 = smul.addr %s367, 2
        %s369 = smul.addr %s368, 8
        %s370 = scalar_lea.vmem %s4, %s369
        %v371 = vld [vmem:[%s356] sm:$0x1]
        %v372 = vld [vmem:[%s5] sm:$0xff]
        %v373 = vld [vmem:[%s5 + $0x8] sm:$0xff]
        %v374 = vld [vmem:[%s5 + $0x10] sm:$0xff]
        %v375 = vld [vmem:[%s5 + $0x18] sm:$0xff]
        %vm376 = vcmask 261120
        %v378 = vsel %vm376, %v371, 0
        %380 = vmatprep.subr.mxu0 0.0
        %381 = vmatpush1.msra.mxu0 0.0
        %382 = vmatprep.subr.mxu0 0.0
        %383 = vmatpush1.msra.mxu0 0.0
        %384 = vmatprep.subr.mxu0 0.0
        %385 = vmatpush1.msra.mxu0 0.0
        %386 = vmatprep.subr.mxu0 0.0
        %387 = vmatpush1.msra.mxu0 0.0
        %388 = vmatprep.subr.mxu0 0.0
        %389 = vmatpush1.msra.mxu0 0.0
        %390 = vmatprep.subr.mxu0 0.0
        %391 = vmatpush1.msra.mxu0 0.0
        %392 = vmatprep.subr.mxu0 0.0
        %393 = vmatpush1.msra.mxu0 0.0
        %394 = vmatprep.subr.mxu0 0.0
        %395 = vmatpush1.msra.mxu0 0.0
        %396 = vmatprep.subr.mxu0 0.0
        %397 = vmatpush1.msra.mxu0 0.0
        %398 = vmatprep.subr.mxu0 0.0
        %399 = vmatpush1.msra.mxu0 0.0
        %400 = vmatprep.subr.mxu0 0.0
        %401 = vmatpush1.msra.mxu0 0.0
        %402 = vmatprep.subr.mxu0 0.0
        %403 = vmatpush1.msra.mxu0 0.0
        %404 = vmatprep.subr.mxu0 0.0
        %405 = vmatpush1.msra.mxu0 %v375
        %406 = vmatprep.subr.mxu0 0.0
        %407 = vmatpush1.msra.mxu0 %v374
        %408 = vmatprep.subr.mxu0 0.0
        %409 = vmatpush1.msra.mxu0 %v373
        %410 = vmatprep.subr.mxu0 0.0
        %411 = vmatpush1.msra.mxu0 %v372
        %412 = vmatprep.subr.mxu0 0.0
        %413 = vmatpush2.msra.mxu0 0.0
        %414 = vmatprep.subr.mxu0 0.0
        %415 = vmatpush2.msra.mxu0 0.0
        %416 = vmatprep.subr.mxu0 0.0
        %417 = vmatpush2.msra.mxu0 0.0
        %418 = vmatprep.subr.mxu0 0.0
        %419 = vmatpush2.msra.mxu0 0.0
        %420 = vmatprep.subr.mxu0 0.0
        %421 = vmatpush2.msra.mxu0 0.0
        %422 = vmatprep.subr.mxu0 0.0
        %423 = vmatpush2.msra.mxu0 0.0
        %424 = vmatprep.subr.mxu0 0.0
        %425 = vmatpush2.msra.mxu0 0.0
        %426 = vmatprep.subr.mxu0 0.0
        %427 = vmatpush2.msra.mxu0 0.0
        %428 = vmatprep.subr.mxu0 0.0
        %429 = vmatpush2.msra.mxu0 0.0
        %430 = vmatprep.subr.mxu0 0.0
        %431 = vmatpush2.msra.mxu0 0.0
        %432 = vmatprep.subr.mxu0 0.0
        %433 = vmatpush2.msra.mxu0 0.0
        %434 = vmatprep.subr.mxu0 0.0
        %435 = vmatpush2.msra.mxu0 0.0
        %436 = vmatprep.subr.mxu0 0.0
        %437 = vmatpush2.msra.mxu0 0.0
        %438 = vmatprep.subr.mxu0 0.0
        %439 = vmatpush2.msra.mxu0 0.0
        %440 = vmatprep.subr.mxu0 0.0
        %441 = vmatpush2.msra.mxu0 0.0
        %442 = vmatprep.subr.mxu0 0.0
        %443 = vmatpush2.msra.mxu0 0.0
        %444 = vmatprep.mubr.f32.mxu0 0.0
        %445 = vmatmul.mubr.f32.gmra.mxu0 %v378
        %v446 = vpop.f32.mrf.mxu0
        %v447 = vadd.f32 0.0, %v446
        %v448 = vpop.f32.mrf.mxu0
        %449 = vdwg.mxu0
        %v450 = vld [vmem:[%s365] sm:$0x3]
        %v452 = vrot.slane %v450, 6
        %453 = vrot.lane.b32.xlu0 %v452, 127
        %v454 = vpop.permute.xlu0 %453
        %v456 = vrot.slane %v450, 4
        %457 = vrot.lane.b32.xlu0 %v456, 126
        %v458 = vpop.permute.xlu0 %457
        %v460 = vrot.slane %v450, 2
        %461 = vrot.lane.b32.xlu0 %v460, 125
        %v462 = vpop.permute.xlu0 %461
        %464 = vrot.lane.b32.xlu0 %v450, 124
        %v465 = vpop.permute.xlu0 %464
        %vm466 = vcmask 1041408
        %v467 = vsel %vm466, %v450, %v454
        %vm468 = vcmask 1043456
        %v469 = vsel %vm468, %v467, %v458
        %vm470 = vcmask 1045504
        %v471 = vsel %vm470, %v469, %v462
        %v472 = vld [vmem:[%s6] sm:$0xff]
        %v473 = vld [vmem:[%s6 + $0x8] sm:$0xff]
        %vm474 = vcmask 80896
        %v476 = vsel %vm474, %v472, 0
        %v479 = vsel %vm474, %v473, 0
        %v481 = vsel %vm466, %v465, 0
        %483 = vmatprep.subr.mxu0 0.0
        %484 = vmatpush1.msra.mxu0 0.0
        %485 = vmatprep.subr.mxu0 0.0
        %486 = vmatpush1.msra.mxu0 0.0
        %487 = vmatprep.subr.mxu0 0.0
        %488 = vmatpush1.msra.mxu0 0.0
        %489 = vmatprep.subr.mxu0 0.0
        %490 = vmatpush1.msra.mxu0 0.0
        %491 = vmatprep.subr.mxu0 0.0
        %492 = vmatpush1.msra.mxu0 0.0
        %493 = vmatprep.subr.mxu0 0.0
        %494 = vmatpush1.msra.mxu0 0.0
        %495 = vmatprep.subr.mxu0 0.0
        %496 = vmatpush1.msra.mxu0 0.0
        %497 = vmatprep.subr.mxu0 0.0
        %498 = vmatpush1.msra.mxu0 0.0
        %499 = vmatprep.subr.mxu0 0.0
        %500 = vmatpush1.msra.mxu0 0.0
        %501 = vmatprep.subr.mxu0 0.0
        %502 = vmatpush1.msra.mxu0 0.0
        %503 = vmatprep.subr.mxu0 0.0
        %504 = vmatpush1.msra.mxu0 0.0
        %505 = vmatprep.subr.mxu0 0.0
        %506 = vmatpush1.msra.mxu0 0.0
        %507 = vmatprep.subr.mxu0 0.0
        %508 = vmatpush1.msra.mxu0 0.0
        %509 = vmatprep.subr.mxu0 0.0
        %510 = vmatpush1.msra.mxu0 0.0
        %511 = vmatprep.subr.mxu0 0.0
        %512 = vmatpush1.msra.mxu0 %v481
        %513 = vmatprep.subr.mxu0 0.0
        %514 = vmatpush1.msra.mxu0 %v471
        %515 = vmatprep.subr.mxu0 0.0
        %516 = vmatpush2.msra.mxu0 0.0
        %517 = vmatprep.subr.mxu0 0.0
        %518 = vmatpush2.msra.mxu0 0.0
        %519 = vmatprep.subr.mxu0 0.0
        %520 = vmatpush2.msra.mxu0 0.0
        %521 = vmatprep.subr.mxu0 0.0
        %522 = vmatpush2.msra.mxu0 0.0
        %523 = vmatprep.subr.mxu0 0.0
        %524 = vmatpush2.msra.mxu0 0.0
        %525 = vmatprep.subr.mxu0 0.0
        %526 = vmatpush2.msra.mxu0 0.0
        %527 = vmatprep.subr.mxu0 0.0
        %528 = vmatpush2.msra.mxu0 0.0
        %529 = vmatprep.subr.mxu0 0.0
        %530 = vmatpush2.msra.mxu0 0.0
        %531 = vmatprep.subr.mxu0 0.0
        %532 = vmatpush2.msra.mxu0 0.0
        %533 = vmatprep.subr.mxu0 0.0
        %534 = vmatpush2.msra.mxu0 0.0
        %535 = vmatprep.subr.mxu0 0.0
        %536 = vmatpush2.msra.mxu0 0.0
        %537 = vmatprep.subr.mxu0 0.0
        %538 = vmatpush2.msra.mxu0 0.0
        %539 = vmatprep.subr.mxu0 0.0
        %540 = vmatpush2.msra.mxu0 0.0
        %541 = vmatprep.subr.mxu0 0.0
        %542 = vmatpush2.msra.mxu0 0.0
        %543 = vmatprep.subr.mxu0 0.0
        %544 = vmatpush2.msra.mxu0 0.0
        %545 = vmatprep.subr.mxu0 0.0
        %546 = vmatpush2.msra.mxu0 0.0
        %547 = vmatprep.mubr.f32.mxu0 0.0
        %548 = vmatmul.mubr.f32.gmra.mxu0 %v476
        %v549 = vpop.f32.mrf.mxu0
        %v550 = vadd.f32 0.0, %v549
        %v551 = vpop.f32.mrf.mxu0
        %552 = vmatprep.mubr.f32.mxu0 0.0
        %553 = vmatmul.mubr.f32.gmra.mxu0 %v479
        %v554 = vpop.f32.mrf.mxu0
        %v555 = vadd.f32 0.0, %v554
        %v556 = vpop.f32.mrf.mxu0
        %557 = vdwg.mxu0
        %v558 = vlaneseq
        %v559 = vshrl.u32 %v558, 7
        %v560 = vsub.s32 0, %v559
        %v561 = vrot.slane %v447, %v560
        %563 = vbcast.lane.b32.xlu0 %v561, 256
        %v564 = vpop.permute.xlu0 %563
        %s566 = sor.u32 256, 8
        %567 = vbcast.lane.b32.xlu0 %v561, %s566
        %v568 = vpop.permute.xlu0 %567
        %v569 = vadd.f32 %v564, %v550
        %v570 = vadd.f32 %v568, %v555
        %v571 = vld [vmem:[%s361] sm:$0xff]
        %v572 = vld [vmem:[%s361 + $0x8] sm:$0xff]
        %v573 = vadd.f32 %v569, %v571
        %v574 = vadd.f32 %v570, %v572
        %v575 = vtanh.pop %v573
        %v576 = vtanh.pop %v574
        %v577 = vld [vmem:[%s7] sm:$0xff]
        %v578 = vld [vmem:[%s7 + $0x8] sm:$0xff]
        %580 = vset.pattern.permute.xlu0 0
        %581 = vperm.xlu0 %580, %v577
        %v582 = vpop.permute.xlu0 %581
        %585 = vset.pattern.permute.xlu0 0
        %586 = vperm.xlu0 %585, %v578
        %v587 = vpop.permute.xlu0 %586
        %v589 = vmul.f32 %v575, %v582
        %v590 = vmul.f32 %v576, %v587
        %vm591 = vcmask 130048
        %v592 = vsel %vm591, %v589, 0.0
        %v593 = vsel %vm591, %v590, 0.0
        %v594 = vadd.f32 %v592, %v593
        %v595 = vrot.slane %v594, 4
        %v596 = vadd.f32 %v594, %v595
        %v597 = vrot.slane %v596, 2
        %v598 = vadd.f32 %v596, %v597
        %v599 = vrot.slane %v598, 1
        %v600 = vadd.f32 %v598, %v599
        %v601 = vlaneseq
        %v602 = vshrl.u32 %v601, 7
        %v603 = vlaneseq
        %v604 = vand.u32 %v603, 127
        %vm605 = vcmp.eq.s32.totalorder %v602, 0
        %s606 = sld [smem:[#allocation3 + %s33]]
        %v607 = vstv %s606
        %v608 = vsel %vm605, %v607, 0
        %vm609 = vcmp.lt.s32.totalorder %v604, %v608
        %v610 = vsel %vm609, %v600, -1e+30
        %vm611 = vcmask 122880
        %v612 = vsel %vm611, %v610, -inf
        %613 = vmax.xlane.f32.xlu0 %v612
        %v614 = vpop.xlane.xlu0 %613
        %v615 = vsub.f32 %v610, %v614
        %v616 = vmul.f32 %v615, 1.442695
        %v617 = vpow.pop %v616
        %v618 = vsel %vm611, %v617, 0.0
        %619 = vadd.xlane.f32.xlu0 %v618
        %v620 = vpop.xlane.xlu0 %619
        %v621 = vrcp.pop %v620
        %v622 = vmul.f32 %v617, %v621
        %623 = vst.msk [vmem:[%s353] sm:$0x1] %vm611, %v622
        %v624 = vld [vmem:[%s370] sm:$0xff]
        %v625 = vld [vmem:[%s370 + $0x8] sm:$0xff]
        %v627 = vsel %vm591, %v622, 0
        %629 = vmatprep.subr.mxu0 0.0
        %630 = vmatpush1.msra.mxu0 0.0
        %631 = vmatprep.subr.mxu0 0.0
        %632 = vmatpush1.msra.mxu0 0.0
        %633 = vmatprep.subr.mxu0 0.0
        %634 = vmatpush1.msra.mxu0 0.0
        %635 = vmatprep.subr.mxu0 0.0
        %636 = vmatpush1.msra.mxu0 0.0
        %637 = vmatprep.subr.mxu0 0.0
        %638 = vmatpush1.msra.mxu0 0.0
        %639 = vmatprep.subr.mxu0 0.0
        %640 = vmatpush1.msra.mxu0 0.0
        %641 = vmatprep.subr.mxu0 0.0
        %642 = vmatpush1.msra.mxu0 0.0
        %643 = vmatprep.subr.mxu0 0.0
        %644 = vmatpush1.msra.mxu0 0.0
        %645 = vmatprep.subr.mxu0 0.0
        %646 = vmatpush1.msra.mxu0 0.0
        %647 = vmatprep.subr.mxu0 0.0
        %648 = vmatpush1.msra.mxu0 0.0
        %649 = vmatprep.subr.mxu0 0.0
        %650 = vmatpush1.msra.mxu0 0.0
        %651 = vmatprep.subr.mxu0 0.0
        %652 = vmatpush1.msra.mxu0 0.0
        %653 = vmatprep.subr.mxu0 0.0
        %654 = vmatpush1.msra.mxu0 0.0
        %655 = vmatprep.subr.mxu0 0.0
        %656 = vmatpush1.msra.mxu0 0.0
        %657 = vmatprep.subr.mxu0 0.0
        %658 = vmatpush1.msra.mxu0 %v625
        %659 = vmatprep.subr.mxu0 0.0
        %660 = vmatpush1.msra.mxu0 %v624
        %661 = vmatprep.subr.mxu0 0.0
        %662 = vmatpush2.msra.mxu0 0.0
        %663 = vmatprep.subr.mxu0 0.0
        %664 = vmatpush2.msra.mxu0 0.0
        %665 = vmatprep.subr.mxu0 0.0
        %666 = vmatpush2.msra.mxu0 0.0
        %667 = vmatprep.subr.mxu0 0.0
        %668 = vmatpush2.msra.mxu0 0.0
        %669 = vmatprep.subr.mxu0 0.0
        %670 = vmatpush2.msra.mxu0 0.0
        %671 = vmatprep.subr.mxu0 0.0
        %672 = vmatpush2.msra.mxu0 0.0
        %673 = vmatprep.subr.mxu0 0.0
        %674 = vmatpush2.msra.mxu0 0.0
        %675 = vmatprep.subr.mxu0 0.0
        %676 = vmatpush2.msra.mxu0 0.0
        %677 = vmatprep.subr.mxu0 0.0
        %678 = vmatpush2.msra.mxu0 0.0
        %679 = vmatprep.subr.mxu0 0.0
        %680 = vmatpush2.msra.mxu0 0.0
        %681 = vmatprep.subr.mxu0 0.0
        %682 = vmatpush2.msra.mxu0 0.0
        %683 = vmatprep.subr.mxu0 0.0
        %684 = vmatpush2.msra.mxu0 0.0
        %685 = vmatprep.subr.mxu0 0.0
        %686 = vmatpush2.msra.mxu0 0.0
        %687 = vmatprep.subr.mxu0 0.0
        %688 = vmatpush2.msra.mxu0 0.0
        %689 = vmatprep.subr.mxu0 0.0
        %690 = vmatpush2.msra.mxu0 0.0
        %691 = vmatprep.subr.mxu0 0.0
        %692 = vmatpush2.msra.mxu0 0.0
        %693 = vmatprep.mubr.f32.mxu0 0.0
        %694 = vmatmul.mubr.f32.gmra.mxu0 %v627
        %v695 = vpop.f32.mrf.mxu0
        %v696 = vadd.f32 0.0, %v695
        %v697 = vpop.f32.mrf.mxu0
        %698 = vdwg.mxu0
        %vm699 = vcmask 253952
        %700 = vst.msk [vmem:[%s347] sm:$0x1] %vm699, %v696
        %s701 = sand.u32 %s208, 1
        %s702 = scalar_lea.sflag [#allocation5], %s701
        %s703 = sand.u32 %s208, 1
        %s704 = scalar_lea.vmem [#allocation4], %s703
        %s705 = sand.u32 %s234, 1
        %s706 = scalar_lea.sflag [#allocation7], %s705
        %s707 = sand.u32 %s234, 1
        %s708 = scalar_lea.vmem [#allocation6], %s707
        // Predicated region
        $region49: #{attention_forward.1} parent=47 // pred_check
          %p709 = pneg %p218
        $region50: #{attention_forward.1} parent=47 // pred_check_branch
          %711 = sbr.rel (%p709) target = $region52
        $region51: #{attention_forward.1} parent=47 // pred_region
          %s713 = ssub.s32 16, 16
          %714 = vsyncadd %s702, %s713
          %s715 = smul.addr %s33, 16
          %s716 = scalar_lea.hbm %s8, %s715
          %s718 = sshll.u32 %s704, 4
          %s719 = int_to_ptr.vmem [resolvable:$true] %s718
          %721 = dma.vmem_to_hbm [thread:$0]  %s719, 16, %s716, %s702
        $region52: #{attention_forward.1} parent=47 // pred_fallthru
          _
        // Predicated region
        $region53: #{attention_forward.1} parent=47 // pred_check
          %p722 = pneg %p244
        $region54: #{attention_forward.1} parent=47 // pred_check_branch
          %724 = sbr.rel (%p722) target = $region56
        $region55: #{attention_forward.1} parent=47 // pred_region
          %s726 = ssub.s32 16, 16
          %727 = vsyncadd %s706, %s726
          %s728 = smul.addr %s33, 16
          %s729 = scalar_lea.hbm %s9, %s728
          %s731 = sshll.u32 %s708, 4
          %s732 = int_to_ptr.vmem [resolvable:$true] %s731
          %734 = dma.vmem_to_hbm [thread:$0]  %s732, 16, %s729, %s706
        $region56: #{attention_forward.1} parent=47 // pred_fallthru
          _
      $region48: #{attention_forward.1} parent=5 // pred_fallthru
        _
      %p735 = scmp.le.s32.totalorder 2, %s28
      // Predicated region
      $region57: #{attention_forward.1} parent=5 // pred_check
        %p736 = pneg %p735
      $region58: #{attention_forward.1} parent=5 // pred_check_branch
        %738 = sbr.rel (%p736) target = $region60
      $region59: #{attention_forward.1} parent=5 // pred_region
        %s739 = ssub.s32 %s28, 2
        // Predicated region
        $region61: #{attention_forward.1} parent=59 // pred_check
          %p740 = pneg %p224
        $region62: #{attention_forward.1} parent=59 // pred_check_branch
          %742 = sbr.rel (%p740) target = $region64
        $region63: #{attention_forward.1} parent=59 // pred_region
          %s743 = sand.u32 %s209, 1
          %s744 = scalar_lea.sflag [#allocation5], %s743
          %s745 = sand.u32 %s209, 1
          %s746 = scalar_lea.vmem [#allocation4], %s745
          %747 = dma.done %s744, 16
        $region64: #{attention_forward.1} parent=59 // pred_fallthru
          _
        // Predicated region
        $region65: #{attention_forward.1} parent=59 // pred_check
          %p748 = pneg %p250
        $region66: #{attention_forward.1} parent=59 // pred_check_branch
          %750 = sbr.rel (%p748) target = $region68
        $region67: #{attention_forward.1} parent=59 // pred_region
          %s751 = sand.u32 %s235, 1
          %s752 = scalar_lea.sflag [#allocation7], %s751
          %s753 = sand.u32 %s235, 1
          %s754 = scalar_lea.vmem [#allocation6], %s753
          %755 = dma.done %s752, 16
        $region68: #{attention_forward.1} parent=59 // pred_fallthru
          _
      $region60: #{attention_forward.1} parent=5 // pred_fallthru
        _
    $region6: #{attention_forward.1} parent=1 // loop_footer
      %s32 = sadd.s32 1, %s28
    $region7: #{attention_forward.1} parent=1 // loop_footer_branch
      %27 = sbr.rel target = $region3
    $region8: #{attention_forward.1} parent=1 // loop_exit
      _
    %756 = vsyncpa [#allocation5], 1
    %s757 = scalar_lea.sflag [#allocation5], 1
    %758 = vsyncpa %s757, 1
    %759 = vsyncpa [#allocation7], 1
    %s760 = scalar_lea.sflag [#allocation7], 1
    %761 = vsyncpa %s760, 1

</llo_original>
